<compile_context>
chip_gen: v7x
topology: tpu7x:2x2x1
jax: 0.10.0
libtpu: 0.0.40
codegen_flags: <defaults>
</compile_context>

<pallas_src>
import functools

import jax
import jax.numpy as jnp
from jax.experimental import pallas as pl
from jax.experimental.pallas import tpu as pltpu


def _round_up(x, m):
    return ((x + m - 1) // m) * m


# Lane-padded VMEM footprint per batch row (f32): two double-buffered inputs padded
# to 128 lanes (~2 KiB/row) + h1/h2/accumulator temporaries (each padded to 128
# lanes) + the lane-dense output slab.  ~8 KiB/row is a safe upper estimate.
_VMEM_BYTES_PER_ROW = 8 * 1024
_VMEM_TILE_BUDGET = 40 << 20     # tile footprint cap; fits v5e/v6e and v7x (64 MiB phys)
_VMEM_LIMIT_BYTES = 48 << 20     # raise scoped VMEM limit (v5e default is only 16 MiB)
_MIN_TILES = 2                   # keep both v7x TensorCores busy on mid-size batches


def gail_disc_kernel(s_ref, a_ref, w1s_ref, w1a_ref, b1_ref, w2_ref, b2_ref,
                     w3_ref, b3_ref, o_ref):
    """One batch tile: s (tm, obs), a (tm, act) -> o (1, 1, tm) probabilities."""
    work_dtype = s_ref.dtype

    # Layer 1: concat(states, actions) @ w1 == states @ w1[:obs] + actions @ w1[obs:]
    acc = jnp.dot(s_ref[...], w1s_ref[...], preferred_element_type=jnp.float32)
    acc = acc + jnp.dot(a_ref[...], w1a_ref[...], preferred_element_type=jnp.float32)
    h1 = jnp.tanh(acc + b1_ref[...]).astype(work_dtype)                 # (tm, 64)

    # Layer 2.
    h2 = jnp.tanh(
        jnp.dot(h1, w2_ref[...], preferred_element_type=jnp.float32)
        + b2_ref[...]).astype(work_dtype)                               # (tm, 32)

    # Layer 3, lane-dense: w3_row (1, 32) contracted with h2's last dim -> (1, tm).
    logit = jax.lax.dot_general(
        w3_ref[...], h2,
        dimension_numbers=(((1,), (1,)), ((), ())),
        preferred_element_type=jnp.float32)                             # (1, tm)

    o_ref[0] = jax.nn.sigmoid(logit + b3_ref[...])                      # (1, tm)


def gail_discriminator(states, actions, params, *, block_rows=4096,
                       compute_dtype=jnp.float32):
    """states: (B, obs_dim), actions: (B, act_dim) -> (B, 1) probability.

    compute_dtype=jnp.bfloat16 halves HBM read traffic / EUP work on v6e/v7x but
    will not meet a 1e-5 tolerance; matmuls always accumulate in f32.
    """
    w1, b1, w2, b2, w3, b3 = params
    B, obs_dim = states.shape
    act_dim = actions.shape[1]

    # Split the first weight instead of concatenating the activations.
    w1s = w1[:obs_dim].astype(compute_dtype)     # (obs_dim, 64)
    w1a = w1[obs_dim:].astype(compute_dtype)     # (act_dim, 64)
    w2c = w2.astype(compute_dtype)               # (64, 32)
    w3r = w3.T.astype(compute_dtype)             # (1, 32) -- lane-dense final layer
    b1 = b1.astype(jnp.float32)
    b2 = b2.astype(jnp.float32)
    b3 = b3.astype(jnp.float32)
    states = states.astype(compute_dtype)
    actions = actions.astype(compute_dtype)

    # Batch tile: multiple of 8 sublanes, capped by block_rows, the lane-padded
    # VMEM budget, and a >=_MIN_TILES split so multi-TC chips get work.
    max_tm_vmem = max(8, (_VMEM_TILE_BUDGET // _VMEM_BYTES_PER_ROW) // 8 * 8)
    tm = max(8, min(
        _round_up(block_rows, 8),
        max_tm_vmem,
        _round_up(pl.cdiv(B, _MIN_TILES), 8),
        _round_up(B, 8),
    ))
    Bp = _round_up(B, tm)
    if Bp != B:
        pad = Bp - B
        states = jnp.pad(states, ((0, pad), (0, 0)))
        actions = jnp.pad(actions, ((0, pad), (0, 0)))
    num_tiles = Bp // tm

    d_in = obs_dim + act_dim
    weight_bytes = sum(int(a.size) * a.dtype.itemsize
                       for a in (w1s, w1a, b1, w2c, b2, w3r, b3))
    cost = pl.CostEstimate(
        flops=2 * Bp * (d_in * 64 + 64 * 32 + 32 * 1),
        transcendentals=Bp * (64 + 32 + 1),
        bytes_accessed=int(states.nbytes) + int(actions.nbytes)
                       + Bp * 4 + weight_bytes,
    )

    row_spec = lambda a: pl.BlockSpec((tm, a.shape[1]), lambda i: (i, 0))
    const_spec = lambda a: pl.BlockSpec(a.shape, lambda i: (0,) * a.ndim)

    out = pl.pallas_call(
        gail_disc_kernel,
        out_shape=jax.ShapeDtypeStruct((num_tiles, 1, tm), jnp.float32),
        grid=(num_tiles,),
        in_specs=[
            row_spec(states), row_spec(actions),
            const_spec(w1s), const_spec(w1a), const_spec(b1),
            const_spec(w2c), const_spec(b2),
            const_spec(w3r), const_spec(b3),
        ],
        out_specs=pl.BlockSpec((1, 1, tm), lambda i: (i, 0, 0)),
        compiler_params=pltpu.CompilerParams(
            dimension_semantics=("parallel",),      # batch tiles across TCs (v7x)
            vmem_limit_bytes=_VMEM_LIMIT_BYTES),
        cost_estimate=cost,
    )(states, actions, w1s, w1a, b1, w2c, b2, w3r, b3)

    # Layout plumbing only: lane-dense slab -> (B, 1) column.
    return out.reshape(Bp, 1)[:B]


def init_params(key, obs_dim, act_dim):
    d_in = obs_dim + act_dim
    ks = jax.random.split(key, 6)

    # Deterministic synthetic init (PyTorch-like uniform fan-in scaling).
    def lin(kw, kb, fan_in, fan_out):
        bound = 1.0 / jnp.sqrt(fan_in)
        w = jax.random.uniform(kw, (fan_in, fan_out), jnp.float32, -bound, bound)
        b = jax.random.uniform(kb, (1, fan_out), jnp.float32, -bound, bound)
        return w, b

    w1, b1 = lin(ks[0], ks[1], d_in, 64)
    w2, b2 = lin(ks[2], ks[3], 64, 32)
    w3, b3 = lin(ks[4], ks[5], 32, 1)
    return (w1, b1, w2, b2, w3, b3)


def reference(states, actions, params):
    w1, b1, w2, b2, w3, b3 = params
    x = jnp.concatenate([states, actions], axis=1)
    h1 = jnp.tanh(x @ w1 + b1)
    h2 = jnp.tanh(h1 @ w2 + b2)
    return jax.nn.sigmoid(h2 @ w3 + b3)


if __name__ == "__main__":
    key = jax.random.PRNGKey(0)
    k_s, k_a, k_p = jax.random.split(key, 3)

    # Small shape consistent with the module (obs_dim=8, act_dim=4).
    B, obs_dim, act_dim = 8, 8, 4
    states = jax.random.normal(k_s, (B, obs_dim), jnp.float32)
    actions = jax.random.normal(k_a, (B, act_dim), jnp.float32)
    params = init_params(k_p, obs_dim, act_dim)

    out = gail_discriminator(states, actions, params)
    out = jax.block_until_ready(out)
    ref = reference(states, actions, params)
    assert out.shape == (B, 1)
    assert jnp.allclose(out, ref, atol=1e-5, rtol=1e-5)

    # Explicit small-tile path: 3 tiles of 256 rows, padded batch.
    B2 = 600
    k_s2, k_a2 = jax.random.split(jax.random.PRNGKey(1), 2)
    states2 = jax.random.normal(k_s2, (B2, obs_dim), jnp.float32)
    actions2 = jax.random.normal(k_a2, (B2, act_dim), jnp.float32)
    out2 = gail_discriminator(states2, actions2, params, block_rows=256)
    out2 = jax.block_until_ready(out2)
    ref2 = reference(states2, actions2, params)
    assert out2.shape == (B2, 1)
    assert jnp.allclose(out2, ref2, atol=1e-5, rtol=1e-5)

    # Default (large-tile) path with the >=2-tile balanced split.
    B3 = 3000
    k_s3, k_a3 = jax.random.split(jax.random.PRNGKey(2), 2)
    states3 = jax.random.normal(k_s3, (B3, obs_dim), jnp.float32)
    actions3 = jax.random.normal(k_a3, (B3, act_dim), jnp.float32)
    out3 = gail_discriminator(states3, actions3, params)
    out3 = jax.block_until_ready(out3)
    ref3 = reference(states3, actions3, params)
    assert out3.shape == (B3, 1)
    assert jnp.allclose(out3, ref3, atol=1e-5, rtol=1e-5)

    print("KERNEL_OK")
</pallas_src>

<mosaic_0001>
module attributes {stable_mosaic.version = 11 : i64} {
  func.func @gail_disc_kernel(%arg0: i32, %arg1: memref<8x8xf32, #tpu.memory_space<vmem>>, %arg2: memref<8x4xf32, #tpu.memory_space<vmem>>, %arg3: memref<8x64xf32, #tpu.memory_space<vmem>>, %arg4: memref<4x64xf32, #tpu.memory_space<vmem>>, %arg5: memref<1x64xf32, #tpu.memory_space<vmem>>, %arg6: memref<64x32xf32, #tpu.memory_space<vmem>>, %arg7: memref<1x32xf32, #tpu.memory_space<vmem>>, %arg8: memref<1x32xf32, #tpu.memory_space<vmem>>, %arg9: memref<1x1xf32, #tpu.memory_space<vmem>>, %arg10: memref<1x1x8xf32, #tpu.memory_space<vmem>>) attributes {dimension_semantics = [#tpu.dimension_semantics<parallel>], iteration_bounds = array<i64: 1>, scalar_prefetch = 0 : i64, scratch_operands = 0 : i64, tpu.core_type = #tpu.core_type<tc>, window_params = [{transform_indices = @transform_0, window_bounds = array<i64: 8, 8>}, {transform_indices = @transform_1, window_bounds = array<i64: 8, 4>}, {pipeline_mode = #tpu.pipeline_mode<synchronous>, transform_indices = @transform_2, window_bounds = array<i64: 8, 64>}, {pipeline_mode = #tpu.pipeline_mode<synchronous>, transform_indices = @transform_3, window_bounds = array<i64: 4, 64>}, {pipeline_mode = #tpu.pipeline_mode<synchronous>, transform_indices = @transform_4, window_bounds = array<i64: 1, 64>}, {pipeline_mode = #tpu.pipeline_mode<synchronous>, transform_indices = @transform_5, window_bounds = array<i64: 64, 32>}, {pipeline_mode = #tpu.pipeline_mode<synchronous>, transform_indices = @transform_6, window_bounds = array<i64: 1, 32>}, {pipeline_mode = #tpu.pipeline_mode<synchronous>, transform_indices = @transform_7, window_bounds = array<i64: 1, 32>}, {pipeline_mode = #tpu.pipeline_mode<synchronous>, transform_indices = @transform_8, window_bounds = array<i64: 1, 1>}, {transform_indices = @transform_9, window_bounds = array<i64: 1, 1, 8>}]} {
    %c0 = arith.constant 0 : index
    %c0_0 = arith.constant 0 : index
    %0 = vector.load %arg1[%c0, %c0_0] : memref<8x8xf32, #tpu.memory_space<vmem>>, vector<8x8xf32>
    %c0_1 = arith.constant 0 : index
    %c0_2 = arith.constant 0 : index
    %1 = vector.load %arg3[%c0_1, %c0_2] : memref<8x64xf32, #tpu.memory_space<vmem>>, vector<8x64xf32>
    %cst = arith.constant dense<0.000000e+00> : vector<8x64xf32>
    %2 = tpu.matmul %0, %1, %cst {dimension_numbers = #tpu.dot_dimension_numbers<[1], [0], [0], [1], [0, 0, 1, 1], [], []>} : vector<8x8xf32>, vector<8x64xf32>, vector<8x64xf32> -> vector<8x64xf32>
    %c0_3 = arith.constant 0 : index
    %c0_4 = arith.constant 0 : index
    %3 = vector.load %arg2[%c0_3, %c0_4] : memref<8x4xf32, #tpu.memory_space<vmem>>, vector<8x4xf32>
    %c0_5 = arith.constant 0 : index
    %c0_6 = arith.constant 0 : index
    %4 = vector.load %arg4[%c0_5, %c0_6] : memref<4x64xf32, #tpu.memory_space<vmem>>, vector<4x64xf32>
    %cst_7 = arith.constant dense<0.000000e+00> : vector<8x64xf32>
    %5 = tpu.matmul %3, %4, %cst_7 {dimension_numbers = #tpu.dot_dimension_numbers<[1], [0], [0], [1], [0, 0, 1, 1], [], []>} : vector<8x4xf32>, vector<4x64xf32>, vector<8x64xf32> -> vector<8x64xf32>
    %6 = arith.addf %2, %5 : vector<8x64xf32>
    %c0_8 = arith.constant 0 : index
    %c0_9 = arith.constant 0 : index
    %7 = vector.load %arg5[%c0_8, %c0_9] : memref<1x64xf32, #tpu.memory_space<vmem>>, vector<1x64xf32>
    %8 = vector.broadcast %7 : vector<1x64xf32> to vector<8x64xf32>
    %9 = arith.addf %6, %8 : vector<8x64xf32>
    %10 = math.tanh %9 : vector<8x64xf32>
    %c0_10 = arith.constant 0 : index
    %c0_11 = arith.constant 0 : index
    %11 = vector.load %arg6[%c0_10, %c0_11] : memref<64x32xf32, #tpu.memory_space<vmem>>, vector<64x32xf32>
    %cst_12 = arith.constant dense<0.000000e+00> : vector<8x32xf32>
    %12 = tpu.matmul %10, %11, %cst_12 {dimension_numbers = #tpu.dot_dimension_numbers<[1], [0], [0], [1], [0, 0, 1, 1], [], []>} : vector<8x64xf32>, vector<64x32xf32>, vector<8x32xf32> -> vector<8x32xf32>
    %c0_13 = arith.constant 0 : index
    %c0_14 = arith.constant 0 : index
    %13 = vector.load %arg7[%c0_13, %c0_14] : memref<1x32xf32, #tpu.memory_space<vmem>>, vector<1x32xf32>
    %14 = vector.broadcast %13 : vector<1x32xf32> to vector<8x32xf32>
    %15 = arith.addf %12, %14 : vector<8x32xf32>
    %16 = math.tanh %15 : vector<8x32xf32>
    %c0_15 = arith.constant 0 : index
    %c0_16 = arith.constant 0 : index
    %17 = vector.load %arg8[%c0_15, %c0_16] : memref<1x32xf32, #tpu.memory_space<vmem>>, vector<1x32xf32>
    %cst_17 = arith.constant dense<0.000000e+00> : vector<1x8xf32>
    %18 = tpu.matmul %17, %16, %cst_17 {dimension_numbers = #tpu.dot_dimension_numbers<[1], [1], [0], [0], [0, 0, 1, 0], [], []>} : vector<1x32xf32>, vector<8x32xf32>, vector<1x8xf32> -> vector<1x8xf32>
    %c0_18 = arith.constant 0 : index
    %c0_19 = arith.constant 0 : index
    %19 = vector.load %arg9[%c0_18, %c0_19] : memref<1x1xf32, #tpu.memory_space<vmem>>, vector<1x1xf32>
    %20 = vector.broadcast %19 : vector<1x1xf32> to vector<1x8xf32>
    %21 = arith.addf %18, %20 : vector<1x8xf32>
    %22 = arith.negf %21 : vector<1x8xf32>
    %23 = math.exp %22 : vector<1x8xf32>
    %cst_20 = arith.constant 1.000000e+00 : f32
    %24 = vector.broadcast %cst_20 : f32 to vector<1x8xf32>
    %25 = arith.addf %24, %23 : vector<1x8xf32>
    %26 = arith.divf %24, %25 : vector<1x8xf32>
    %c0_21 = arith.constant 0 : index
    %c0_22 = arith.constant 0 : index
    %c0_23 = arith.constant 0 : index
    %27 = vector.load %arg10[%c0_21, %c0_22, %c0_23] : memref<1x1x8xf32, #tpu.memory_space<vmem>>, vector<1x1x8xf32>
    %28 = vector.shape_cast %27 : vector<1x1x8xf32> to vector<1x8xf32>
    %29 = vector.shape_cast %26 : vector<1x8xf32> to vector<1x1x8xf32>
    tpu.vector_store %arg10[%c0_21, %c0_22, %c0_23], %29 {strides = array<i32>} : memref<1x1x8xf32, #tpu.memory_space<vmem>>, vector<1x1x8xf32>,
    return
  }
  func.func @transform_0(%arg0: i32) -> (i32, i32) {
    %c0_i32 = arith.constant 0 : i32
    %c0_i32_0 = arith.constant 0 : i32
    return %arg0, %c0_i32 : i32, i32
  }
  func.func @transform_1(%arg0: i32) -> (i32, i32) {
    %c0_i32 = arith.constant 0 : i32
    %c0_i32_0 = arith.constant 0 : i32
    return %arg0, %c0_i32 : i32, i32
  }
  func.func @transform_2(%arg0: i32) -> (i32, i32) {
    %c0_i32 = arith.constant 0 : i32
    %c0_i32_0 = arith.constant 0 : i32
    %c0_i32_1 = arith.constant 0 : i32
    return %c0_i32, %c0_i32_0 : i32, i32
  }
  func.func @transform_3(%arg0: i32) -> (i32, i32) {
    %c0_i32 = arith.constant 0 : i32
    %c0_i32_0 = arith.constant 0 : i32
    %c0_i32_1 = arith.constant 0 : i32
    return %c0_i32, %c0_i32_0 : i32, i32
  }
  func.func @transform_4(%arg0: i32) -> (i32, i32) {
    %c0_i32 = arith.constant 0 : i32
    %c0_i32_0 = arith.constant 0 : i32
    %c0_i32_1 = arith.constant 0 : i32
    return %c0_i32, %c0_i32_0 : i32, i32
  }
  func.func @transform_5(%arg0: i32) -> (i32, i32) {
    %c0_i32 = arith.constant 0 : i32
    %c0_i32_0 = arith.constant 0 : i32
    %c0_i32_1 = arith.constant 0 : i32
    return %c0_i32, %c0_i32_0 : i32, i32
  }
  func.func @transform_6(%arg0: i32) -> (i32, i32) {
    %c0_i32 = arith.constant 0 : i32
    %c0_i32_0 = arith.constant 0 : i32
    %c0_i32_1 = arith.constant 0 : i32
    return %c0_i32, %c0_i32_0 : i32, i32
  }
  func.func @transform_7(%arg0: i32) -> (i32, i32) {
    %c0_i32 = arith.constant 0 : i32
    %c0_i32_0 = arith.constant 0 : i32
    %c0_i32_1 = arith.constant 0 : i32
    return %c0_i32, %c0_i32_0 : i32, i32
  }
  func.func @transform_8(%arg0: i32) -> (i32, i32) {
    %c0_i32 = arith.constant 0 : i32
    %c0_i32_0 = arith.constant 0 : i32
    %c0_i32_1 = arith.constant 0 : i32
    return %c0_i32, %c0_i32_0 : i32, i32
  }
  func.func @transform_9(%arg0: i32) -> (i32, i32, i32) {
    %c0_i32 = arith.constant 0 : i32
    %c0_i32_0 = arith.constant 0 : i32
    %c0_i32_1 = arith.constant 0 : i32
    return %arg0, %c0_i32, %c0_i32_0 : i32, i32, i32
  }
}

</mosaic_0001>

<llo_original>
// kernel: tpu_custom_call.1
$region0: #{tpu_custom_call.1}
  #allocation0 [shape = 'u32[]', space=smem, size = 0x4, offset = 0x4, fixed_abs, tag = 'smem constant byte address 0x4 - core index']
  #allocation1 [shape = 'u32[144,128]{1,0:T(1,128)}', space=vmem, size = 0x12000, scoped, tag = 'internal scratch']
  #allocation2 [shape = 'f32[1,1]{1,0:T(1,128)S(1)}', space=vmem, size = 0x200, scoped, tag = 'scoped memory for tpu_custom_call.1']
  %s0 = inlined_call_operand.vmem [shape: f32[8,8], index: 0, kind: input, shape index: {}]
  %s1 = inlined_call_operand.vmem [shape: f32[8,4], index: 1, kind: input, shape index: {}]
  %s2 = inlined_call_operand.vmem [shape: f32[8,64], index: 2, kind: input, shape index: {}]
  %s3 = inlined_call_operand.vmem [shape: f32[4,64], index: 3, kind: input, shape index: {}]
  %s4 = inlined_call_operand.vmem [shape: f32[1,64], index: 4, kind: input, shape index: {}]
  %s5 = inlined_call_operand.vmem [shape: f32[64,32], index: 5, kind: input, shape index: {}]
  %s6 = inlined_call_operand.vmem [shape: f32[1,32], index: 6, kind: input, shape index: {}]
  %s7 = inlined_call_operand.vmem [shape: f32[1,32], index: 7, kind: input, shape index: {}]
  %s8 = inlined_call_operand.<no memory space> [shape: f32[1,1], index: 8, kind: input, shape index: {}]
  %s9 = inlined_call_operand.hbm [shape: f32[1,1,8], index: 9, kind: output, shape index: {}]
  %s10 = sld [smem:[#allocation0]]
  $region46: #{tpu_custom_call.1} parent=0
    _
  %s12 = ssub.s32 1, %s10
  %s13 = scalar_select 0, %s12, %s10
  %v14 = vstv %s8
  %15 = vst [vmem:[#allocation2] sm:$0x1] %v14
  $region1: #{tpu_custom_call.1} parent=0
    #allocation3 [shape = 'u8[512]{0}', space=vmem, size = 0x400, scoped, tag = 'output window, operand 0, single buffered']
    #allocation4 [shape = 's32[1]{0}', space=sflag, size = 0x4, scoped, tag = 'scoped memory for tpu_custom_call.1']
    %16 = vsyncpa [#allocation4], 0
    // Predicated region
    $region2: #{tpu_custom_call.1} parent=1 // pred_check
      _
    $region3: #{tpu_custom_call.1} parent=1 // pred_check_branch
      %18 = sbr.rel (0) target = $region5
    $region4: #{tpu_custom_call.1} parent=1 // pred_region
      _
    $region5: #{tpu_custom_call.1} parent=1 // pred_fallthru
      _
    // Predicated region
    $region6: #{tpu_custom_call.1} parent=1 // pred_check
      _
    $region7: #{tpu_custom_call.1} parent=1 // pred_check_branch
      %20 = sbr.rel (0) target = $region9
    $region8: #{tpu_custom_call.1} parent=1 // pred_region
      _
    $region9: #{tpu_custom_call.1} parent=1 // pred_fallthru
      _
    // Predicated region
    $region10: #{tpu_custom_call.1} parent=1 // pred_check
      _
    $region11: #{tpu_custom_call.1} parent=1 // pred_check_branch
      %22 = sbr.rel (0) target = $region13
    $region12: #{tpu_custom_call.1} parent=1 // pred_region
      _
    $region13: #{tpu_custom_call.1} parent=1 // pred_fallthru
      _
    // Predicated region
    $region14: #{tpu_custom_call.1} parent=1 // pred_check
      _
    $region15: #{tpu_custom_call.1} parent=1 // pred_check_branch
      %24 = sbr.rel (0) target = $region17
    $region16: #{tpu_custom_call.1} parent=1 // pred_region
      _
    $region17: #{tpu_custom_call.1} parent=1 // pred_fallthru
      _
    // Predicated region
    $region18: #{tpu_custom_call.1} parent=1 // pred_check
      _
    $region19: #{tpu_custom_call.1} parent=1 // pred_check_branch
      %26 = sbr.rel (0) target = $region21
    $region20: #{tpu_custom_call.1} parent=1 // pred_region
      _
    $region21: #{tpu_custom_call.1} parent=1 // pred_fallthru
      _
    // Predicated region
    $region22: #{tpu_custom_call.1} parent=1 // pred_check
      _
    $region23: #{tpu_custom_call.1} parent=1 // pred_check_branch
      %28 = sbr.rel (0) target = $region25
    $region24: #{tpu_custom_call.1} parent=1 // pred_region
      _
    $region25: #{tpu_custom_call.1} parent=1 // pred_fallthru
      _
    // Predicated region
    $region26: #{tpu_custom_call.1} parent=1 // pred_check
      _
    $region27: #{tpu_custom_call.1} parent=1 // pred_check_branch
      %30 = sbr.rel (0) target = $region29
    $region28: #{tpu_custom_call.1} parent=1 // pred_region
      _
    $region29: #{tpu_custom_call.1} parent=1 // pred_fallthru
      _
    // Predicated region
    $region30: #{tpu_custom_call.1} parent=1 // pred_check
      _
    $region31: #{tpu_custom_call.1} parent=1 // pred_check_branch
      %32 = sbr.rel (0) target = $region33
    $region32: #{tpu_custom_call.1} parent=1 // pred_region
      _
    $region33: #{tpu_custom_call.1} parent=1 // pred_fallthru
      _
    // Predicated region
    $region34: #{tpu_custom_call.1} parent=1 // pred_check
      _
    $region35: #{tpu_custom_call.1} parent=1 // pred_check_branch
      %34 = sbr.rel (0) target = $region37
    $region36: #{tpu_custom_call.1} parent=1 // pred_region
      _
    $region37: #{tpu_custom_call.1} parent=1 // pred_fallthru
      _
    %v35 = vld [vmem:[%s0] sm:$0xff]
    %v36 = vld [vmem:[%s2] sm:$0xff]
    %v37 = vld [vmem:[%s1] sm:$0xff]
    %v38 = vld [vmem:[%s3] sm:$0xf]
    %vm39 = vcmask 31744
    %v41 = vsel %vm39, %v37, 0
    %vm43 = vcmask 1043456
    %v45 = vsel %vm43, %v38, 0
    %47 = vmatprep.subr.mxu0 0.0
    %48 = vmatpush1.msra.mxu0 %v45
    %49 = vmatprep.subr.mxu0 0.0
    %50 = vmatpush1.msra.mxu0 0.0
    %51 = vmatprep.subr.mxu0 0.0
    %52 = vmatpush1.msra.mxu0 0.0
    %53 = vmatprep.subr.mxu0 0.0
    %54 = vmatpush1.msra.mxu0 0.0
    %55 = vmatprep.subr.mxu0 0.0
    %56 = vmatpush1.msra.mxu0 0.0
    %57 = vmatprep.subr.mxu0 0.0
    %58 = vmatpush1.msra.mxu0 0.0
    %59 = vmatprep.subr.mxu0 0.0
    %60 = vmatpush1.msra.mxu0 0.0
    %61 = vmatprep.subr.mxu0 0.0
    %62 = vmatpush1.msra.mxu0 0.0
    %63 = vmatprep.subr.mxu0 0.0
    %64 = vmatpush1.msra.mxu0 0.0
    %65 = vmatprep.subr.mxu0 0.0
    %66 = vmatpush1.msra.mxu0 0.0
    %67 = vmatprep.subr.mxu0 0.0
    %68 = vmatpush1.msra.mxu0 0.0
    %69 = vmatprep.subr.mxu0 0.0
    %70 = vmatpush1.msra.mxu0 0.0
    %71 = vmatprep.subr.mxu0 0.0
    %72 = vmatpush1.msra.mxu0 0.0
    %73 = vmatprep.subr.mxu0 0.0
    %74 = vmatpush1.msra.mxu0 0.0
    %75 = vmatprep.subr.mxu0 0.0
    %76 = vmatpush1.msra.mxu0 0.0
    %77 = vmatprep.subr.mxu0 0.0
    %78 = vmatpush1.msra.mxu0 0.0
    %79 = vmatprep.subr.mxu0 0.0
    %80 = vmatpush1.msra.mxu0 0.0
    %81 = vmatprep.subr.mxu0 0.0
    %82 = vmatpush1.msra.mxu0 0.0
    %83 = vmatprep.subr.mxu0 0.0
    %84 = vmatpush1.msra.mxu0 0.0
    %85 = vmatprep.subr.mxu0 0.0
    %86 = vmatpush1.msra.mxu0 0.0
    %87 = vmatprep.subr.mxu0 0.0
    %88 = vmatpush1.msra.mxu0 0.0
    %89 = vmatprep.subr.mxu0 0.0
    %90 = vmatpush1.msra.mxu0 0.0
    %91 = vmatprep.subr.mxu0 0.0
    %92 = vmatpush1.msra.mxu0 0.0
    %93 = vmatprep.subr.mxu0 0.0
    %94 = vmatpush1.msra.mxu0 0.0
    %95 = vmatprep.subr.mxu0 0.0
    %96 = vmatpush1.msra.mxu0 0.0
    %97 = vmatprep.subr.mxu0 0.0
    %98 = vmatpush1.msra.mxu0 0.0
    %99 = vmatprep.subr.mxu0 0.0
    %100 = vmatpush1.msra.mxu0 0.0
    %101 = vmatprep.subr.mxu0 0.0
    %102 = vmatpush1.msra.mxu0 0.0
    %103 = vmatprep.subr.mxu0 0.0
    %104 = vmatpush1.msra.mxu0 0.0
    %105 = vmatprep.subr.mxu0 0.0
    %106 = vmatpush1.msra.mxu0 0.0
    %107 = vmatprep.subr.mxu0 0.0
    %108 = vmatpush1.msra.mxu0 0.0
    %109 = vmatprep.subr.mxu0 0.0
    %110 = vmatpush1.msra.mxu0 0.0
    %111 = vmatprep.mubr.f32.mxu0 0.0
    %112 = vmatmul.mubr.f32.gmra.mrb[0].mxu0 %v41
    %v113 = vpop.f32.mrb[0].mxu0
    %v114 = vadd.f32 0.0, %v113
    %v115 = vpop.f32.mrb[0].mxu0
    %116 = vdwg.mxu0
    %vm117 = vcmask 64512
    %v119 = vsel %vm117, %v35, 0
    %121 = vmatprep.subr.mxu0 0.0
    %122 = vmatpush1.msra.mxu0 %v36
    %123 = vmatprep.subr.mxu0 0.0
    %124 = vmatpush1.msra.mxu0 0.0
    %125 = vmatprep.subr.mxu0 0.0
    %126 = vmatpush1.msra.mxu0 0.0
    %127 = vmatprep.subr.mxu0 0.0
    %128 = vmatpush1.msra.mxu0 0.0
    %129 = vmatprep.subr.mxu0 0.0
    %130 = vmatpush1.msra.mxu0 0.0
    %131 = vmatprep.subr.mxu0 0.0
    %132 = vmatpush1.msra.mxu0 0.0
    %133 = vmatprep.subr.mxu0 0.0
    %134 = vmatpush1.msra.mxu0 0.0
    %135 = vmatprep.subr.mxu0 0.0
    %136 = vmatpush1.msra.mxu0 0.0
    %137 = vmatprep.subr.mxu0 0.0
    %138 = vmatpush1.msra.mxu0 0.0
    %139 = vmatprep.subr.mxu0 0.0
    %140 = vmatpush1.msra.mxu0 0.0
    %141 = vmatprep.subr.mxu0 0.0
    %142 = vmatpush1.msra.mxu0 0.0
    %143 = vmatprep.subr.mxu0 0.0
    %144 = vmatpush1.msra.mxu0 0.0
    %145 = vmatprep.subr.mxu0 0.0
    %146 = vmatpush1.msra.mxu0 0.0
    %147 = vmatprep.subr.mxu0 0.0
    %148 = vmatpush1.msra.mxu0 0.0
    %149 = vmatprep.subr.mxu0 0.0
    %150 = vmatpush1.msra.mxu0 0.0
    %151 = vmatprep.subr.mxu0 0.0
    %152 = vmatpush1.msra.mxu0 0.0
    %153 = vmatprep.subr.mxu0 0.0
    %154 = vmatpush1.msra.mxu0 0.0
    %155 = vmatprep.subr.mxu0 0.0
    %156 = vmatpush1.msra.mxu0 0.0
    %157 = vmatprep.subr.mxu0 0.0
    %158 = vmatpush1.msra.mxu0 0.0
    %159 = vmatprep.subr.mxu0 0.0
    %160 = vmatpush1.msra.mxu0 0.0
    %161 = vmatprep.subr.mxu0 0.0
    %162 = vmatpush1.msra.mxu0 0.0
    %163 = vmatprep.subr.mxu0 0.0
    %164 = vmatpush1.msra.mxu0 0.0
    %165 = vmatprep.subr.mxu0 0.0
    %166 = vmatpush1.msra.mxu0 0.0
    %167 = vmatprep.subr.mxu0 0.0
    %168 = vmatpush1.msra.mxu0 0.0
    %169 = vmatprep.subr.mxu0 0.0
    %170 = vmatpush1.msra.mxu0 0.0
    %171 = vmatprep.subr.mxu0 0.0
    %172 = vmatpush1.msra.mxu0 0.0
    %173 = vmatprep.subr.mxu0 0.0
    %174 = vmatpush1.msra.mxu0 0.0
    %175 = vmatprep.subr.mxu0 0.0
    %176 = vmatpush1.msra.mxu0 0.0
    %177 = vmatprep.subr.mxu0 0.0
    %178 = vmatpush1.msra.mxu0 0.0
    %179 = vmatprep.subr.mxu0 0.0
    %180 = vmatpush1.msra.mxu0 0.0
    %181 = vmatprep.subr.mxu0 0.0
    %182 = vmatpush1.msra.mxu0 0.0
    %183 = vmatprep.subr.mxu0 0.0
    %184 = vmatpush1.msra.mxu0 0.0
    %185 = vmatprep.mubr.f32.mxu0 0.0
    %186 = vmatmul.mubr.f32.gmra.mrb[0].mxu0 %v119
    %v187 = vpop.f32.mrb[0].mxu0
    %v188 = vadd.f32 %v114, %v187
    %v189 = vpop.f32.mrb[0].mxu0
    %190 = vdwg.mxu0
    %v191 = vld [vmem:[%s4] sm:$0x1]
    %v193 = vlaneseq
    %v194 = vshrl.u32 %v193, 7
    %v195 = vsub.s32 0, %v194
    %v196 = vrot.slane %v191, %v195
    %v198 = vadd.f32 %v188, %v196
    %v199 = vtanh.pop %v198
    %v200 = vld [vmem:[%s5] sm:$0xff]
    %v201 = vld [vmem:[%s5 + $0x8] sm:$0xff]
    %v202 = vld [vmem:[%s5 + $0x10] sm:$0xff]
    %v203 = vld [vmem:[%s5 + $0x18] sm:$0xff]
    %v204 = vld [vmem:[%s5 + $0x20] sm:$0xff]
    %v205 = vld [vmem:[%s5 + $0x28] sm:$0xff]
    %v206 = vld [vmem:[%s5 + $0x30] sm:$0xff]
    %v207 = vld [vmem:[%s5 + $0x38] sm:$0xff]
    %v208 = vld [vmem:[%s6] sm:$0x1]
    %v210 = vlaneseq
    %v211 = vshrl.u32 %v210, 7
    %v212 = vsub.s32 0, %v211
    %v213 = vrot.slane %v208, %v212
    %vm215 = vcmask 523264
    %v217 = vsel %vm215, %v199, 0
    %219 = vmatprep.subr.mxu0 0.0
    %220 = vmatpush1.msra.mxu0 %v200
    %221 = vmatprep.subr.mxu0 0.0
    %222 = vmatpush1.msra.mxu0 %v201
    %223 = vmatprep.subr.mxu0 0.0
    %224 = vmatpush1.msra.mxu0 %v202
    %225 = vmatprep.subr.mxu0 0.0
    %226 = vmatpush1.msra.mxu0 %v203
    %227 = vmatprep.subr.mxu0 0.0
    %228 = vmatpush1.msra.mxu0 %v204
    %229 = vmatprep.subr.mxu0 0.0
    %230 = vmatpush1.msra.mxu0 %v205
    %231 = vmatprep.subr.mxu0 0.0
    %232 = vmatpush1.msra.mxu0 %v206
    %233 = vmatprep.subr.mxu0 0.0
    %234 = vmatpush1.msra.mxu0 %v207
    %235 = vmatprep.subr.mxu0 0.0
    %236 = vmatpush1.msra.mxu0 0.0
    %237 = vmatprep.subr.mxu0 0.0
    %238 = vmatpush1.msra.mxu0 0.0
    %239 = vmatprep.subr.mxu0 0.0
    %240 = vmatpush1.msra.mxu0 0.0
    %241 = vmatprep.subr.mxu0 0.0
    %242 = vmatpush1.msra.mxu0 0.0
    %243 = vmatprep.subr.mxu0 0.0
    %244 = vmatpush1.msra.mxu0 0.0
    %245 = vmatprep.subr.mxu0 0.0
    %246 = vmatpush1.msra.mxu0 0.0
    %247 = vmatprep.subr.mxu0 0.0
    %248 = vmatpush1.msra.mxu0 0.0
    %249 = vmatprep.subr.mxu0 0.0
    %250 = vmatpush1.msra.mxu0 0.0
    %251 = vmatprep.subr.mxu0 0.0
    %252 = vmatpush1.msra.mxu0 0.0
    %253 = vmatprep.subr.mxu0 0.0
    %254 = vmatpush1.msra.mxu0 0.0
    %255 = vmatprep.subr.mxu0 0.0
    %256 = vmatpush1.msra.mxu0 0.0
    %257 = vmatprep.subr.mxu0 0.0
    %258 = vmatpush1.msra.mxu0 0.0
    %259 = vmatprep.subr.mxu0 0.0
    %260 = vmatpush1.msra.mxu0 0.0
    %261 = vmatprep.subr.mxu0 0.0
    %262 = vmatpush1.msra.mxu0 0.0
    %263 = vmatprep.subr.mxu0 0.0
    %264 = vmatpush1.msra.mxu0 0.0
    %265 = vmatprep.subr.mxu0 0.0
    %266 = vmatpush1.msra.mxu0 0.0
    %267 = vmatprep.subr.mxu0 0.0
    %268 = vmatpush1.msra.mxu0 0.0
    %269 = vmatprep.subr.mxu0 0.0
    %270 = vmatpush1.msra.mxu0 0.0
    %271 = vmatprep.subr.mxu0 0.0
    %272 = vmatpush1.msra.mxu0 0.0
    %273 = vmatprep.subr.mxu0 0.0
    %274 = vmatpush1.msra.mxu0 0.0
    %275 = vmatprep.subr.mxu0 0.0
    %276 = vmatpush1.msra.mxu0 0.0
    %277 = vmatprep.subr.mxu0 0.0
    %278 = vmatpush1.msra.mxu0 0.0
    %279 = vmatprep.subr.mxu0 0.0
    %280 = vmatpush1.msra.mxu0 0.0
    %281 = vmatprep.subr.mxu0 0.0
    %282 = vmatpush1.msra.mxu0 0.0
    %283 = vmatprep.mubr.f32.mxu0 0.0
    %284 = vmatmul.mubr.f32.gmra.mrb[0].mxu0 %v217
    %v285 = vpop.f32.mrb[0].mxu0
    %v286 = vadd.f32 %v213, %v285
    %v287 = vpop.f32.mrb[0].mxu0
    %288 = vdwg.mxu0
    %v289 = vtanh.pop %v286
    %v290 = vld [vmem:[%s7] sm:$0x1]
    %v291 = vld [vmem:[#allocation2] sm:$0x1]
    %293 = vset.pattern.permute.xlu0 0
    %294 = vperm.xlu0 %293, %v291
    %v295 = vpop.permute.xlu0 %294
    %v297 = vlaneseq
    %v298 = vshrl.u32 %v297, 7
    %v299 = vsub.s32 0, %v298
    %v300 = vrot.slane %v295, %v299
    %vm301 = vcmask 261120
    %v303 = vsel %vm301, %v290, 0
    %v306 = vsel %vm301, %v289, 0
    %308 = vmatprep.subr.mxu0 0.0
    %309 = vmatpush1.xpose.msra.mxu0 %v306
    %310 = vmatprep.subr.mxu0 0.0
    %311 = vmatpush1.xpose.msra.mxu0 0.0
    %312 = vmatprep.subr.mxu0 0.0
    %313 = vmatpush1.xpose.msra.mxu0 0.0
    %314 = vmatprep.subr.mxu0 0.0
    %315 = vmatpush1.xpose.msra.mxu0 0.0
    %316 = vmatprep.subr.mxu0 0.0
    %317 = vmatpush1.xpose.msra.mxu0 0.0
    %318 = vmatprep.subr.mxu0 0.0
    %319 = vmatpush1.xpose.msra.mxu0 0.0
    %320 = vmatprep.subr.mxu0 0.0
    %321 = vmatpush1.xpose.msra.mxu0 0.0
    %322 = vmatprep.subr.mxu0 0.0
    %323 = vmatpush1.xpose.msra.mxu0 0.0
    %324 = vmatprep.subr.mxu0 0.0
    %325 = vmatpush1.xpose.msra.mxu0 0.0
    %326 = vmatprep.subr.mxu0 0.0
    %327 = vmatpush1.xpose.msra.mxu0 0.0
    %328 = vmatprep.subr.mxu0 0.0
    %329 = vmatpush1.xpose.msra.mxu0 0.0
    %330 = vmatprep.subr.mxu0 0.0
    %331 = vmatpush1.xpose.msra.mxu0 0.0
    %332 = vmatprep.subr.mxu0 0.0
    %333 = vmatpush1.xpose.msra.mxu0 0.0
    %334 = vmatprep.subr.mxu0 0.0
    %335 = vmatpush1.xpose.msra.mxu0 0.0
    %336 = vmatprep.subr.mxu0 0.0
    %337 = vmatpush1.xpose.msra.mxu0 0.0
    %338 = vmatprep.subr.mxu0 0.0
    %339 = vmatpush1.xpose.msra.mxu0 0.0
    %340 = vmatprep.subr.mxu0 0.0
    %341 = vmatpush1.xpose.msra.mxu0 0.0
    %342 = vmatprep.subr.mxu0 0.0
    %343 = vmatpush1.xpose.msra.mxu0 0.0
    %344 = vmatprep.subr.mxu0 0.0
    %345 = vmatpush1.xpose.msra.mxu0 0.0
    %346 = vmatprep.subr.mxu0 0.0
    %347 = vmatpush1.xpose.msra.mxu0 0.0
    %348 = vmatprep.subr.mxu0 0.0
    %349 = vmatpush1.xpose.msra.mxu0 0.0
    %350 = vmatprep.subr.mxu0 0.0
    %351 = vmatpush1.xpose.msra.mxu0 0.0
    %352 = vmatprep.subr.mxu0 0.0
    %353 = vmatpush1.xpose.msra.mxu0 0.0
    %354 = vmatprep.subr.mxu0 0.0
    %355 = vmatpush1.xpose.msra.mxu0 0.0
    %356 = vmatprep.subr.mxu0 0.0
    %357 = vmatpush1.xpose.msra.mxu0 0.0
    %358 = vmatprep.subr.mxu0 0.0
    %359 = vmatpush1.xpose.msra.mxu0 0.0
    %360 = vmatprep.subr.mxu0 0.0
    %361 = vmatpush1.xpose.msra.mxu0 0.0
    %362 = vmatprep.subr.mxu0 0.0
    %363 = vmatpush1.xpose.msra.mxu0 0.0
    %364 = vmatprep.subr.mxu0 0.0
    %365 = vmatpush1.xpose.msra.mxu0 0.0
    %366 = vmatprep.subr.mxu0 0.0
    %367 = vmatpush1.xpose.msra.mxu0 0.0
    %368 = vmatprep.subr.mxu0 0.0
    %369 = vmatpush1.xpose.msra.mxu0 0.0
    %370 = vmatprep.subr.mxu0 0.0
    %371 = vmatpush1.xpose.msra.mxu0 0.0
    %372 = vmatprep.mubr.f32.mxu0 0.0
    %373 = vmatmul.mubr.f32.gmra.mrb[0].mxu0 %v303
    %v374 = vpop.f32.mrb[0].mxu0
    %v375 = vadd.f32 %v300, %v374
    %v376 = vpop.f32.mrb[0].mxu0
    %377 = vdwg.mxu0
    %v378 = vxor.u32 %v375, 2147483648
    %v379 = vmul.f32 %v378, 1.442695
    %v380 = vpow.pop %v379
    %v381 = vadd.f32 %v380, 1.0
    %v382 = vrcp.pop %v381
    %v383 = vmul.f32 1.0, %v382
    %vm384 = vcmask 57344
    %385 = vst.msk [vmem:[#allocation3] sm:$0x1] %vm384, %v383
    // Predicated region
    $region38: #{tpu_custom_call.1} parent=1 // pred_check
      _
    $region39: #{tpu_custom_call.1} parent=1 // pred_check_branch
      %387 = sbr.rel (0) target = $region41
    $region40: #{tpu_custom_call.1} parent=1 // pred_region
      %s389 = ssub.s32 16, 16
      %390 = vsyncadd [#allocation4], %s389
      %s392 = sshll.u32 [#allocation3], 4
      %s393 = int_to_ptr.vmem [resolvable:$true] %s392
      %395 = dma.vmem_to_hbm [thread:$0]  %s393, 16, %s9, [#allocation4]
    $region41: #{tpu_custom_call.1} parent=1 // pred_fallthru
      _
    // Predicated region
    $region42: #{tpu_custom_call.1} parent=1 // pred_check
      _
    $region43: #{tpu_custom_call.1} parent=1 // pred_check_branch
      %397 = sbr.rel (0) target = $region45
    $region44: #{tpu_custom_call.1} parent=1 // pred_region
      %398 = dma.done [#allocation4], 16
    $region45: #{tpu_custom_call.1} parent=1 // pred_fallthru
      _
    %399 = vsyncpa [#allocation4], 1

</llo_original>
